<compile_context>
chip_gen: v5e
topology: v5e:2x2
jax: 0.10.0
libtpu: 0.0.40
codegen_flags: <defaults>
</compile_context>

<pallas_src>
import functools

import numpy as np
import jax
import jax.numpy as jnp
from jax import lax
from jax.experimental import pallas as pl
from jax.experimental.pallas import tpu as pltpu

MARGIN = 0.3


def _round_up(x, m):
    return (x + m - 1) // m * m


def _hc_loss_kernel(feats_ref, o_ref, centers_ref, *,
                    batch, n, cs, label_num, tile_b, inv_cs, margin,
                    needs_row_mask):
    """Grid axis 0 tiles the batch; per-chunk sums accumulate in VMEM scratch.

    feats_ref  : (tile_b, feat_dim)  feats dtype
    o_ref      : (1, 1)              SMEM f32 scalar loss
    centers_ref: (n_pad, feat_dim)   VMEM f32 accumulator (per-chunk sums)
    """
    step = pl.program_id(0)
    n_pad = centers_ref.shape[0]

    @pl.when(step == 0)
    def _init():
        centers_ref[...] = jnp.zeros_like(centers_ref)

    feats = feats_ref[...]
    if needs_row_mask:
        # Zero rows past the real batch on the ragged last tile.  The OOB part
        # of a partial block is undefined (possibly NaN); do NOT rely on zero
        # entries of S to cancel it (0 * NaN = NaN through the MXU).
        row_global = step * tile_b + lax.broadcasted_iota(
            jnp.int32, (tile_b, 1), 0)
        feats = jnp.where(row_global < batch, feats, jnp.zeros_like(feats))

    # In-kernel 0/1 chunk-selection tile (torch.chunk order):
    # S[r, c] = 1  iff  global column step*tile_b + c lies in [r*cs, (r+1)*cs).
    row_id = lax.broadcasted_iota(jnp.int32, (n_pad, tile_b), 0)
    col_global = step * tile_b + lax.broadcasted_iota(
        jnp.int32, (n_pad, tile_b), 1)
    row_start = row_id * cs
    sel = (col_global >= row_start) & (col_global < row_start + cs)
    s_tile = sel.astype(feats.dtype)

    # Partial per-chunk feature sums for this batch tile (MXU, f32 accumulate).
    centers_ref[...] += lax.dot_general(
        s_tile, feats,
        dimension_numbers=(((1,), (0,)), ((), ())),
        preferred_element_type=jnp.float32)

    @pl.when(step == pl.num_programs(0) - 1)
    def _finalize():
        centers = centers_ref[...] * jnp.float32(inv_cs)          # (n_pad, feat_dim)

        # Pairwise squared Euclidean distances via Gram matrix (same formula
        # and 1e-12 clamp as the PyTorch reference).
        sq = jnp.sum(centers * centers, axis=1, keepdims=True)    # (n_pad, 1)
        gram = lax.dot_general(                                   # (n_pad, n_pad)
            centers, centers,
            dimension_numbers=(((1,), (1,)), ((), ())),
            preferred_element_type=jnp.float32)
        dist2 = jnp.maximum(sq + sq.T - 2.0 * gram, jnp.float32(1e-12))

        # Same-label mask from indices: targets = cat([uniq, uniq]) means
        # targets[i] == targets[j]  <=>  i == j or |i - j| == label_num.
        row_idx = lax.broadcasted_iota(jnp.int32, (n_pad, n_pad), 0)
        col_idx = lax.broadcasted_iota(jnp.int32, (n_pad, n_pad), 1)
        same = ((row_idx == col_idx)
                | (row_idx - col_idx == label_num)
                | (col_idx - row_idx == label_num))
        col_valid = col_idx < n                                   # mask n-padding

        neg_big = jnp.float32(-1e30)
        pos_big = jnp.float32(1e30)
        # Hardest positive / negative on squared distances (sqrt is monotone).
        ap2 = jnp.max(jnp.where(same & col_valid, dist2, neg_big),
                      axis=1, keepdims=True)                      # (n_pad, 1)
        an2 = jnp.min(jnp.where((~same) & col_valid, dist2, pos_big),
                      axis=1, keepdims=True)                      # (n_pad, 1)
        dist_ap = jnp.sqrt(jnp.maximum(ap2, 0.0))
        dist_an = jnp.sqrt(an2)

        # MarginRankingLoss(dist_an, dist_ap, y=1), mean over the n real rows.
        per_row = jnp.maximum(dist_ap - dist_an + jnp.float32(margin), 0.0)
        row_valid = lax.broadcasted_iota(jnp.int32, (n_pad, 1), 0) < n
        per_row = jnp.where(row_valid, per_row, 0.0)
        o_ref[0, 0] = jnp.sum(per_row) * jnp.float32(1.0 / n)


def make_hc_loss(labels, feat_dim, feats_dtype=jnp.float32, margin=MARGIN,
                 target_tile_bytes=8 * 1024 * 1024):
    """One-time host-side setup; returns a jitted feats -> scalar loss fn.

    feats_dtype is only used for the tile-size heuristic; pass feats in their
    native dtype (do NOT cast f32->bf16 in a wrapper just for the kernel).
    """
    labels_np = np.asarray(jax.device_get(labels))
    label_uni = np.unique(labels_np)                 # sorted unique labels
    label_num = int(label_uni.shape[0])
    n = 2 * label_num
    batch = int(labels_np.shape[0])
    assert batch % n == 0, "batch must be divisible by 2 * num_unique_labels"
    # TODO(synk): torch.chunk allows an unequal trailing chunk; only the
    # equal-chunk case (the one used in practice for this loss) is implemented.
    cs = batch // n

    itemsize = np.dtype(feats_dtype).itemsize
    n_pad = _round_up(n, 8)

    # Batch tiling: ~8 MiB, 128-aligned tiles to amortize per-step pipeline
    # overhead; a single (8-aligned) tile when the whole batch is small.
    row_bytes = feat_dim * itemsize
    if batch * row_bytes <= target_tile_bytes:
        tile_b = _round_up(batch, 8)
    else:
        tile_b = max(128, (target_tile_bytes // row_bytes) // 128 * 128)
    num_tiles = pl.cdiv(batch, tile_b)
    needs_row_mask = (batch % tile_b) != 0

    kernel = functools.partial(
        _hc_loss_kernel, batch=batch, n=n, cs=cs, label_num=label_num,
        tile_b=tile_b, inv_cs=1.0 / cs, margin=float(margin),
        needs_row_mask=needs_row_mask)

    # Triple-buffer the feats stream once there are enough steps to overlap.
    if num_tiles >= 3:
        feats_spec = pl.BlockSpec((tile_b, feat_dim), lambda i: (i, 0),
                                  pipeline_mode=pl.Buffered(3))
    else:
        feats_spec = pl.BlockSpec((tile_b, feat_dim), lambda i: (i, 0))

    grid_spec = pltpu.PrefetchScalarGridSpec(
        num_scalar_prefetch=0,
        grid=(num_tiles,),
        in_specs=[feats_spec],
        out_specs=pl.BlockSpec((1, 1), lambda i: (0, 0),
                               memory_space=pltpu.MemorySpace.SMEM),
        scratch_shapes=[pltpu.VMEM((n_pad, feat_dim), jnp.float32)],
    )

    cost = pl.CostEstimate(
        flops=2 * batch * n_pad * feat_dim + 2 * n_pad * n_pad * feat_dim,
        transcendentals=2 * n_pad,
        bytes_accessed=batch * feat_dim * itemsize + 4,
    )

    call = pl.pallas_call(
        kernel,
        out_shape=jax.ShapeDtypeStruct((1, 1), jnp.float32),
        grid_spec=grid_spec,
        compiler_params=pltpu.CompilerParams(
            dimension_semantics=("arbitrary",),
            vmem_limit_bytes=32 * 1024 * 1024),
        cost_estimate=cost,
    )

    @jax.jit
    def run(feats):
        # No pad / astype here: either would add a full extra HBM read+write
        # pass over feats before the (HBM-bound) kernel even starts.
        return call(feats)[0, 0]

    return run


_HC_LOSS_CACHE = {}


def hc_loss(feats, labels, margin=MARGIN):
    """Convenience wrapper; for hot paths build once with make_hc_loss()."""
    labels_np = np.asarray(jax.device_get(labels))
    key = (labels_np.tobytes(), labels_np.shape, int(feats.shape[1]),
           str(jnp.result_type(feats)), float(margin))
    fn = _HC_LOSS_CACHE.get(key)
    if fn is None:
        fn = make_hc_loss(labels_np, int(feats.shape[1]),
                          feats_dtype=jnp.result_type(feats), margin=margin)
        _HC_LOSS_CACHE[key] = fn
    return fn(feats)


def hc_loss_ref(feats, labels, margin=MARGIN):
    """Pure numpy reference mirroring the PyTorch module."""
    feats = np.asarray(jax.device_get(feats), dtype=np.float32)
    labels_np = np.asarray(jax.device_get(labels))
    label_uni = np.unique(labels_np)
    label_num = len(label_uni)
    n = 2 * label_num
    cs = feats.shape[0] // n
    centers = feats.reshape(n, cs, -1).mean(axis=1)
    sq = (centers ** 2).sum(axis=1, keepdims=True)
    dist = sq + sq.T - 2.0 * centers @ centers.T
    dist = np.sqrt(np.clip(dist, 1e-12, None))
    targets = np.concatenate([label_uni, label_uni])
    mask = targets[:, None] == targets[None, :]
    dist_ap = np.array([dist[i][mask[i]].max() for i in range(n)])
    dist_an = np.array([dist[i][~mask[i]].min() for i in range(n)])
    return np.mean(np.maximum(dist_ap - dist_an + margin, 0.0))


if __name__ == "__main__":
    key = jax.random.PRNGKey(0)
    k1, k2 = jax.random.split(key)

    # --- Test 1: single-tile path (original small config). ---------------
    batch, feat_dim = 16, 32          # 4 unique labels -> n = 8 centers, cs = 2
    feats = jax.random.normal(k1, (batch, feat_dim), dtype=jnp.float32)
    # Batch layout expected by HCLoss: [id0,id0,id1,id1,...] for modality A,
    # then the same identity order for modality B.
    labels = jnp.array([0, 0, 1, 1, 2, 2, 3, 3,
                        0, 0, 1, 1, 2, 2, 3, 3], dtype=jnp.int32)
    loss = make_hc_loss(labels, feat_dim)(feats)
    jax.block_until_ready(loss)
    ref = hc_loss_ref(feats, labels)
    # Tolerance leaves headroom for the MXU's f32 contraction mode.
    assert np.allclose(np.asarray(loss), ref, rtol=1e-2, atol=1e-2), (
        np.asarray(loss), ref)

    # --- Test 2: multi-tile path (ragged last tile, in-kernel row mask,
    #     Buffered(3), non-128-multiple feat_dim).  Tiny tile target keeps it
    #     fast while exercising the tiled code path. ------------------------
    label_num2, cs2, feat_dim2 = 5, 30, 200
    batch2 = 2 * label_num2 * cs2                     # 300 rows
    labels2 = jnp.concatenate(
        [jnp.repeat(jnp.arange(label_num2, dtype=jnp.int32), cs2)] * 2)
    feats2 = jax.random.normal(k2, (batch2, feat_dim2), dtype=jnp.float32)
    loss2 = make_hc_loss(labels2, feat_dim2, target_tile_bytes=64 * 1024)(feats2)
    jax.block_until_ready(loss2)
    ref2 = hc_loss_ref(feats2, labels2)
    assert np.allclose(np.asarray(loss2), ref2, rtol=1e-2, atol=1e-2), (
        np.asarray(loss2), ref2)

    print("KERNEL_OK")
</pallas_src>

<mosaic_0001>
module attributes {stable_mosaic.version = 11 : i64} {
  func.func @_hc_loss_kernel(%arg0: i32, %arg1: memref<16x32xf32, #tpu.memory_space<vmem>>, %arg2: memref<1x1xf32, #tpu.memory_space<smem>>, %arg3: memref<8x32xf32, #tpu.memory_space<vmem>>) attributes {dimension_semantics = [#tpu.dimension_semantics<arbitrary>], iteration_bounds = array<i64: 1>, scalar_prefetch = 0 : i64, scratch_operands = 1 : i64, tpu.core_type = #tpu.core_type<tc>, window_params = [{transform_indices = @transform_0, window_bounds = array<i64: 16, 32>}, {transform_indices = @transform_1, window_bounds = array<i64: 1, 1>}]} {
    %c0_i32 = arith.constant 0 : i32
    %0 = arith.cmpi eq, %arg0, %c0_i32 : i32
    %1 = arith.extui %0 : i1 to i32
    %c0_i32_0 = arith.constant 0 : i32
    %2 = arith.cmpi ne, %1, %c0_i32_0 : i32
    scf.if %2 {
      %cst_9 = arith.constant 0.000000e+00 : f32
      %25 = vector.broadcast %cst_9 : f32 to vector<8x32xf32>
      %c0_10 = arith.constant 0 : index
      %c0_11 = arith.constant 0 : index
      %26 = vector.load %arg3[%c0_10, %c0_11] : memref<8x32xf32, #tpu.memory_space<vmem>>, vector<8x32xf32>
      tpu.vector_store %arg3[%c0_10, %c0_11], %25 {strides = array<i32>} : memref<8x32xf32, #tpu.memory_space<vmem>>, vector<8x32xf32>,
    } else {
    }
    %c0 = arith.constant 0 : index
    %c0_1 = arith.constant 0 : index
    %3 = vector.load %arg1[%c0, %c0_1] : memref<16x32xf32, #tpu.memory_space<vmem>>, vector<16x32xf32>
    %4 = tpu.iota {dimensions = array<i32: 0>} : vector<8x16xi32>
    %c16_i32 = arith.constant 16 : i32
    %5 = arith.muli %arg0, %c16_i32 : i32
    %6 = tpu.iota {dimensions = array<i32: 1>} : vector<8x16xi32>
    %7 = vector.broadcast %5 : i32 to vector<8x16xi32>
    %8 = arith.addi %7, %6 : vector<8x16xi32>
    %c2_i32 = arith.constant 2 : i32
    %9 = vector.broadcast %c2_i32 : i32 to vector<8x16xi32>
    %10 = arith.muli %4, %9 : vector<8x16xi32>
    %11 = arith.cmpi sge, %8, %10 : vector<8x16xi32>
    %c2_i32_2 = arith.constant 2 : i32
    %12 = vector.broadcast %c2_i32_2 : i32 to vector<8x16xi32>
    %13 = arith.addi %10, %12 : vector<8x16xi32>
    %14 = arith.cmpi slt, %8, %13 : vector<8x16xi32>
    %15 = arith.andi %11, %14 : vector<8x16xi1>
    %16 = arith.extui %15 : vector<8x16xi1> to vector<8x16xi32>
    %17 = arith.sitofp %16 : vector<8x16xi32> to vector<8x16xf32>
    %c0_3 = arith.constant 0 : index
    %c0_4 = arith.constant 0 : index
    %18 = vector.load %arg3[%c0_3, %c0_4] : memref<8x32xf32, #tpu.memory_space<vmem>>, vector<8x32xf32>
    %cst = arith.constant dense<0.000000e+00> : vector<8x32xf32>
    %19 = tpu.matmul %17, %3, %cst {dimension_numbers = #tpu.dot_dimension_numbers<[1], [0], [0], [1], [0, 0, 1, 1], [], []>} : vector<8x16xf32>, vector<16x32xf32>, vector<8x32xf32> -> vector<8x32xf32>
    %20 = arith.addf %18, %19 : vector<8x32xf32>
    %c0_5 = arith.constant 0 : index
    %c0_6 = arith.constant 0 : index
    %21 = vector.load %arg3[%c0_5, %c0_6] : memref<8x32xf32, #tpu.memory_space<vmem>>, vector<8x32xf32>
    tpu.vector_store %arg3[%c0_5, %c0_6], %20 {strides = array<i32>} : memref<8x32xf32, #tpu.memory_space<vmem>>, vector<8x32xf32>,
    %c0_i32_7 = arith.constant 0 : i32
    %22 = arith.cmpi eq, %arg0, %c0_i32_7 : i32
    %23 = arith.extui %22 : i1 to i32
    %c0_i32_8 = arith.constant 0 : i32
    %24 = arith.cmpi ne, %23, %c0_i32_8 : i32
    scf.if %24 {
      %c0_9 = arith.constant 0 : index
      %c0_10 = arith.constant 0 : index
      %25 = vector.load %arg3[%c0_9, %c0_10] : memref<8x32xf32, #tpu.memory_space<vmem>>, vector<8x32xf32>
      %cst_11 = arith.constant 5.000000e-01 : f32
      %26 = vector.broadcast %cst_11 : f32 to vector<8x32xf32>
      %27 = arith.mulf %25, %26 : vector<8x32xf32>
      %28 = arith.mulf %27, %27 : vector<8x32xf32>
      %cst_12 = arith.constant dense<0.000000e+00> : vector<8xf32>
      %29 = vector.multi_reduction <add>, %28, %cst_12 [1] : vector<8x32xf32> to vector<8xf32>
      %30 = vector.shape_cast %29 : vector<8xf32> to vector<8x1xf32>
      %cst_13 = arith.constant dense<0.000000e+00> : vector<8x8xf32>
      %31 = tpu.matmul %27, %27, %cst_13 {dimension_numbers = #tpu.dot_dimension_numbers<[1], [1], [0], [0], [0, 0, 1, 0], [], []>} : vector<8x32xf32>, vector<8x32xf32>, vector<8x8xf32> -> vector<8x8xf32>
      %32 = tpu.transpose %30, [1, 0] : vector<8x1xf32> -> vector<1x8xf32>
      %33 = vector.broadcast %30 : vector<8x1xf32> to vector<8x8xf32>
      %34 = vector.broadcast %32 : vector<1x8xf32> to vector<8x8xf32>
      %35 = arith.addf %33, %34 : vector<8x8xf32>
      %cst_14 = arith.constant 2.000000e+00 : f32
      %36 = vector.broadcast %cst_14 : f32 to vector<8x8xf32>
      %37 = arith.mulf %36, %31 : vector<8x8xf32>
      %38 = arith.subf %35, %37 : vector<8x8xf32>
      %cst_15 = arith.constant 9.99999996E-13 : f32
      %39 = vector.broadcast %cst_15 : f32 to vector<8x8xf32>
      %40 = arith.maximumf %38, %39 : vector<8x8xf32>
      %41 = tpu.iota {dimensions = array<i32: 0>} : vector<8x8xi32>
      %42 = tpu.iota {dimensions = array<i32: 1>} : vector<8x8xi32>
      %43 = arith.cmpi eq, %41, %42 : vector<8x8xi32>
      %44 = arith.subi %41, %42 : vector<8x8xi32>
      %c4_i32 = arith.constant 4 : i32
      %45 = vector.broadcast %c4_i32 : i32 to vector<8x8xi32>
      %46 = arith.cmpi eq, %44, %45 : vector<8x8xi32>
      %47 = arith.ori %43, %46 : vector<8x8xi1>
      %48 = arith.subi %42, %41 : vector<8x8xi32>
      %c4_i32_16 = arith.constant 4 : i32
      %49 = vector.broadcast %c4_i32_16 : i32 to vector<8x8xi32>
      %50 = arith.cmpi eq, %48, %49 : vector<8x8xi32>
      %51 = arith.ori %47, %50 : vector<8x8xi1>
      %c8_i32 = arith.constant 8 : i32
      %52 = vector.broadcast %c8_i32 : i32 to vector<8x8xi32>
      %53 = arith.cmpi slt, %42, %52 : vector<8x8xi32>
      %54 = arith.andi %51, %53 : vector<8x8xi1>
      %cst_17 = arith.constant -1.000000e+30 : f32
      %55 = vector.broadcast %cst_17 : f32 to vector<8x8xf32>
      %56 = arith.select %54, %40, %55 : vector<8x8xi1>, vector<8x8xf32>
      %cst_18 = arith.constant dense<0xFF800000> : vector<8xf32>
      %57 = vector.multi_reduction <maximumf>, %56, %cst_18 [1] : vector<8x8xf32> to vector<8xf32>
      %58 = vector.shape_cast %57 : vector<8xf32> to vector<8x1xf32>
      %cst_19 = arith.constant dense<true> : vector<8x8xi1>
      %59 = arith.xori %51, %cst_19 : vector<8x8xi1>
      %60 = arith.andi %59, %53 : vector<8x8xi1>
      %cst_20 = arith.constant 1.000000e+30 : f32
      %61 = vector.broadcast %cst_20 : f32 to vector<8x8xf32>
      %62 = arith.select %60, %40, %61 : vector<8x8xi1>, vector<8x8xf32>
      %cst_21 = arith.constant dense<0x7F800000> : vector<8xf32>
      %63 = vector.multi_reduction <minimumf>, %62, %cst_21 [1] : vector<8x8xf32> to vector<8xf32>
      %64 = vector.shape_cast %63 : vector<8xf32> to vector<8x1xf32>
      %cst_22 = arith.constant 0.000000e+00 : f32
      %65 = vector.broadcast %cst_22 : f32 to vector<8x1xf32>
      %66 = arith.maximumf %58, %65 : vector<8x1xf32>
      %67 = math.sqrt %66 : vector<8x1xf32>
      %68 = math.sqrt %64 : vector<8x1xf32>
      %69 = arith.subf %67, %68 : vector<8x1xf32>
      %cst_23 = arith.constant 3.000000e-01 : f32
      %70 = vector.broadcast %cst_23 : f32 to vector<8x1xf32>
      %71 = arith.addf %69, %70 : vector<8x1xf32>
      %cst_24 = arith.constant 0.000000e+00 : f32
      %72 = vector.broadcast %cst_24 : f32 to vector<8x1xf32>
      %73 = arith.maximumf %71, %72 : vector<8x1xf32>
      %74 = tpu.iota {dimensions = array<i32: 0>} : vector<8x1xi32>
      %c8_i32_25 = arith.constant 8 : i32
      %75 = vector.broadcast %c8_i32_25 : i32 to vector<8x1xi32>
      %76 = arith.cmpi slt, %74, %75 : vector<8x1xi32>
      %cst_26 = arith.constant 0.000000e+00 : f32
      %77 = vector.broadcast %cst_26 : f32 to vector<8x1xf32>
      %78 = arith.select %76, %73, %77 : vector<8x1xi1>, vector<8x1xf32>
      %79 = vector.shape_cast %78 : vector<8x1xf32> to vector<1x8x1xf32>
      %cst_27 = arith.constant dense<0.000000e+00> : vector<1xf32>
      %80 = vector.multi_reduction <add>, %79, %cst_27 [1, 2] : vector<1x8x1xf32> to vector<1xf32>
      %81 = vector.shape_cast %80 : vector<1xf32> to vector<1x1x1xf32>
      %82 = vector.extract %81[0, 0, 0] : f32 from vector<1x1x1xf32>
      %cst_28 = arith.constant 1.250000e-01 : f32
      %83 = arith.mulf %82, %cst_28 : f32
      %c0_29 = arith.constant 0 : index
      %c0_30 = arith.constant 0 : index
      %84 = memref.load %arg2[%c0_29, %c0_30] : memref<1x1xf32, #tpu.memory_space<smem>>
      memref.store %83, %arg2[%c0_29, %c0_30] : memref<1x1xf32, #tpu.memory_space<smem>>
    } else {
    }
    return
  }
  func.func @transform_0(%arg0: i32) -> (i32, i32) {
    %c0_i32 = arith.constant 0 : i32
    %c0_i32_0 = arith.constant 0 : i32
    return %arg0, %c0_i32 : i32, i32
  }
  func.func @transform_1(%arg0: i32) -> (i32, i32) {
    %c0_i32 = arith.constant 0 : i32
    %c0_i32_0 = arith.constant 0 : i32
    %c0_i32_1 = arith.constant 0 : i32
    return %c0_i32, %c0_i32_0 : i32, i32
  }
}

</mosaic_0001>

<llo_original>
// kernel: run.1
$region0: #{run.1}
  #allocation0 [shape = 'u32[]', space=smem, size = 0x4, offset = 0x4, fixed_abs, tag = 'smem constant byte address 0x4 - core index']
  #allocation1 [shape = 'u32[72,128]{1,0:T(1,128)}', space=vmem, size = 0x9000, scoped, tag = 'internal scratch']
  #allocation2 [shape = 'f32[8,32]{1,0:T(8,128)}', space=vmem, size = 0x1000, scoped, tag = 'scratch operand']
  %s0 = inlined_call_operand.hbm [shape: f32[16,32], index: 0, kind: input, shape index: {}]
  %s1 = inlined_call_operand.hbm [shape: f32[1,1], index: 1, kind: output, shape index: {}]
  %s2 = sld [smem:[#allocation0]]
  $region26: #{run.1} parent=0
    _
  %s4 = ssub.s32 1, %s2
  %s5 = scalar_select 0, %s4, %s2
  $region1: #{run.1} parent=0
    #allocation3 [shape = 'u8[8192]{0}', space=vmem, size = 0x2000, scoped, tag = 'input window, operand 0, single buffered']
    #allocation4 [shape = 's32[1]{0}', space=sflag, size = 0x4, scoped, tag = 'scoped memory for run.1']
    #allocation5 [shape = 's32[1]{0}', space=sflag, size = 0x4, scoped, tag = 'scoped memory for run.1']
    #allocation6 [shape = 'u8[512]{0}', space=smem, size = 0x200, scoped, tag = 'output window, operand 0, single buffered']
    %6 = vsyncpa [#allocation4], 0
    %7 = vsyncpa [#allocation5], 0
    // Predicated region
    $region2: #{run.1} parent=1 // pred_check
      _
    $region3: #{run.1} parent=1 // pred_check_branch
      %9 = sbr.rel (0) target = $region5
    $region4: #{run.1} parent=1 // pred_region
      %11 = vsyncadd [#allocation4], 0
      %s12 = sshll.u32 %s0, 4
      %s13 = int_to_ptr.hbm [resolvable:$true] %s12
      %s14 = sshll.u32 [#allocation3], 4
      %s15 = int_to_ptr.vmem [resolvable:$true] %s14
      %20 = dma.hbm_to_vmem [thread:$0]  %s13, 256, %s15, [#allocation4], 128, 128, 8
    $region5: #{run.1} parent=1 // pred_fallthru
      _
    // Predicated region
    $region6: #{run.1} parent=1 // pred_check
      _
    $region7: #{run.1} parent=1 // pred_check_branch
      %22 = sbr.rel (0) target = $region9
    $region8: #{run.1} parent=1 // pred_region
      %24 = dma.done [#allocation4], 256
    $region9: #{run.1} parent=1 // pred_fallthru
      _
    %p25 = scmp.eq.s32.totalorder 0, 0
    // Predicated region
    $region10: #{run.1} parent=1 // pred_check
      %p26 = pneg %p25
    $region11: #{run.1} parent=1 // pred_check_branch
      %28 = sbr.rel (%p26) target = $region13
    $region12: #{run.1} parent=1 // pred_region
      %vm29 = vcmask 261120
      %30 = vst.msk [vmem:[#allocation2] sm:$0xff] %vm29, 0.0
    $region13: #{run.1} parent=1 // pred_fallthru
      _
    %v31 = vld [vmem:[#allocation3] sm:$0xff]
    %v32 = vld [vmem:[#allocation3 + $0x8] sm:$0xff]
    %v33 = vlaneseq
    %v34 = vshrl.u32 %v33, 7
    %s35 = smul.u32 0, 16
    %v36 = vlaneseq
    %v37 = vand.u32 %v36, 127
    %v38 = vstv %s35
    %v39 = vadd.s32 %v38, %v37
    %v40 = vmul.u32 %v34, 2
    %vm41 = vcmp.ge.s32.totalorder %v39, %v40
    %v42 = vadd.s32 %v40, 2
    %vm43 = vcmp.lt.s32.totalorder %v39, %v42
    %vm44 = vmand %vm41, %vm43
    %v45 = vsel %vm44, 1, 0
    %v46 = vcvt.s32.f32 %v45
    %v47 = vld [vmem:[#allocation2] sm:$0xff]
    %vm48 = vcmask 130048
    %v50 = vsel %vm48, %v46, 0
    %52 = vmatpush.msra.mxu0 0.0
    %53 = vmatpush.msra.mxu0 0.0
    %54 = vmatpush.msra.mxu0 0.0
    %55 = vmatpush.msra.mxu0 0.0
    %56 = vmatpush.msra.mxu0 0.0
    %57 = vmatpush.msra.mxu0 0.0
    %58 = vmatpush.msra.mxu0 0.0
    %59 = vmatpush.msra.mxu0 0.0
    %60 = vmatpush.msra.mxu0 0.0
    %61 = vmatpush.msra.mxu0 0.0
    %62 = vmatpush.msra.mxu0 0.0
    %63 = vmatpush.msra.mxu0 0.0
    %64 = vmatpush.msra.mxu0 0.0
    %65 = vmatpush.msra.mxu0 0.0
    %66 = vmatpush.msra.mxu0 %v32
    %67 = vmatpush.msra.mxu0 %v31
    %68 = vmatmul.f32.gmra.mxu0 %v50
    %v69 = vpop.f32.mrf.mxu0
    %v70 = vadd.f32 0.0, %v69
    %71 = vdwg.mxu0
    %v72 = vadd.f32 %v47, %v70
    %vm73 = vcmask 261120
    %74 = vst.msk [vmem:[#allocation2] sm:$0xff] %vm73, %v72
    // Predicated region
    $region14: #{run.1} parent=1 // pred_check
      %p75 = pneg %p25
    $region15: #{run.1} parent=1 // pred_check_branch
      %77 = sbr.rel (%p75) target = $region17
    $region16: #{run.1} parent=1 // pred_region
      %v78 = vld [vmem:[#allocation2] sm:$0xff]
      %v79 = vmul.f32 %v78, 0.5
      %v80 = vmul.f32 %v79, %v79
      %v81 = vsel %vm73, %v80, 0.0
      %82 = vadd.xlane.f32.xlu0 %v81
      %v83 = vpop.xlane.xlu0 %82
      %v85 = vsel %vm73, %v79, 0
      %87 = vmatpush.xpose.msra.mxu0 0.0
      %88 = vmatpush.xpose.msra.mxu0 0.0
      %89 = vmatpush.xpose.msra.mxu0 0.0
      %90 = vmatpush.xpose.msra.mxu0 0.0
      %91 = vmatpush.xpose.msra.mxu0 0.0
      %92 = vmatpush.xpose.msra.mxu0 0.0
      %93 = vmatpush.xpose.msra.mxu0 0.0
      %94 = vmatpush.xpose.msra.mxu0 0.0
      %95 = vmatpush.xpose.msra.mxu0 0.0
      %96 = vmatpush.xpose.msra.mxu0 0.0
      %97 = vmatpush.xpose.msra.mxu0 0.0
      %98 = vmatpush.xpose.msra.mxu0 0.0
      %99 = vmatpush.xpose.msra.mxu0 0.0
      %100 = vmatpush.xpose.msra.mxu0 0.0
      %101 = vmatpush.xpose.msra.mxu0 0.0
      %102 = vmatpush.xpose.msra.mxu0 %v85
      %103 = vmatmul.f32.gmra.mxu0 %v85
      %v104 = vpop.f32.mrf.mxu0
      %v105 = vadd.f32 0.0, %v104
      %106 = vdwg.mxu0
      %107 = vxpose.xlu0.b32.start [1/16] %v83, 128
      %108 = vxpose.xlu0.b32.cont [2/16] 0.0, 128
      %109 = vxpose.xlu0.b32.cont [3/16] 0.0, 128
      %110 = vxpose.xlu0.b32.cont [4/16] 0.0, 128
      %111 = vxpose.xlu0.b32.cont [5/16] 0.0, 128
      %112 = vxpose.xlu0.b32.cont [6/16] 0.0, 128
      %113 = vxpose.xlu0.b32.cont [7/16] 0.0, 128
      %114 = vxpose.xlu0.b32.cont [8/16] 0.0, 128
      %115 = vxpose.xlu0.b32.cont [9/16] 0.0, 128
      %116 = vxpose.xlu0.b32.cont [10/16] 0.0, 128
      %117 = vxpose.xlu0.b32.cont [11/16] 0.0, 128
      %118 = vxpose.xlu0.b32.cont [12/16] 0.0, 128
      %119 = vxpose.xlu0.b32.cont [13/16] 0.0, 128
      %120 = vxpose.xlu0.b32.cont [14/16] 0.0, 128
      %121 = vxpose.xlu0.b32.cont [15/16] 0.0, 128
      %122 = vxpose.xlu0.b32.end [16/16] 0.0, 128
      %v123 = vpop.trf.xlu0
      %v124 = vpop.trf.xlu0
      %v125 = vpop.trf.xlu0
      %v126 = vpop.trf.xlu0
      %v127 = vpop.trf.xlu0
      %v128 = vpop.trf.xlu0
      %v129 = vpop.trf.xlu0
      %v130 = vpop.trf.xlu0
      %v131 = vpop.trf.xlu0
      %v132 = vpop.trf.xlu0
      %v133 = vpop.trf.xlu0
      %v134 = vpop.trf.xlu0
      %v135 = vpop.trf.xlu0
      %v136 = vpop.trf.xlu0
      %v137 = vpop.trf.xlu0
      %v138 = vpop.trf.xlu0
      %v139 = vperm.slane %v123, 0
      %v140 = vadd.f32 %v83, %v139
      %v141 = vmul.f32 %v105, 2.0
      %v142 = vsub.f32 %v140, %v141
      %v143 = vmax.f32 %v142, 1e-12
      %vm144 = vcmp.eq.s32.totalorder %v34, %v37
      %v145 = vsub.s32 %v34, %v37
      %vm146 = vcmp.eq.s32.totalorder %v145, 4
      %vm147 = vmor %vm144, %vm146
      %v148 = vsub.s32 %v37, %v34
      %vm149 = vcmp.eq.s32.totalorder %v148, 4
      %vm150 = vmor %vm147, %vm149
      %vm151 = vcmp.lt.s32.totalorder %v37, 8
      %vm152 = vmand %vm150, %vm151
      %v153 = vsel %vm152, %v143, -1e+30
      %vm154 = vcmask 64512
      %v155 = vsel %vm154, %v153, -inf
      %156 = vmax.xlane.f32.xlu0 %v155
      %v157 = vpop.xlane.xlu0 %156
      %vm158 = vmxor %vm150, 1
      %vm159 = vmand %vm158, %vm151
      %v160 = vsel %vm159, %v143, 1e+30
      %v161 = vsel %vm154, %v160, inf
      %162 = vmin.xlane.f32.xlu0 %v161
      %v163 = vpop.xlane.xlu0 %162
      %v164 = vmax.f32 %v157, 0.0
      %v165 = vrsqrt.pop %v164
      %v166 = vmul.f32 %v165, %v164
      %v167 = vmul.f32 %v166, %v165
      %v168 = vmul.f32 0.5, %v167
      %v169 = vsub.f32 1.5, %v168
      %v170 = vmul.f32 %v165, %v169
      %v171 = vmul.f32 %v164, %v170
      %vm172 = vcmp.eq.f32.partialorder %v164, inf
      %v173 = vsel %vm172, %v164, %v171
      %vm174 = vcmp.eq.f32.partialorder %v164, 0.0
      %v175 = vand.u32 %v164, 2147483648
      %v176 = vsel %vm174, %v175, %v173
      %v177 = vrsqrt.pop %v163
      %v178 = vmul.f32 %v177, %v163
      %v179 = vmul.f32 %v178, %v177
      %v180 = vmul.f32 0.5, %v179
      %v181 = vsub.f32 1.5, %v180
      %v182 = vmul.f32 %v177, %v181
      %v183 = vmul.f32 %v163, %v182
      %vm184 = vcmp.eq.f32.partialorder %v163, inf
      %v185 = vsel %vm184, %v163, %v183
      %vm186 = vcmp.eq.f32.partialorder %v163, 0.0
      %v187 = vand.u32 %v163, 2147483648
      %v188 = vsel %vm186, %v187, %v185
      %v189 = vsub.f32 %v176, %v188
      %v190 = vadd.f32 %v189, 0.3
      %v191 = vmax.f32 %v190, 0.0
      %vm192 = vcmp.lt.s32.totalorder %v34, 8
      %v193 = vsel %vm192, %v191, 0.0
      %vm194 = vcmask 7168
      %v195 = vsel %vm194, %v193, 0.0
      %196 = vadd.xlane.f32.xlu0 %v195
      %v197 = vpop.xlane.xlu0 %196
      %v198 = vrot.slane %v197, 4
      %v199 = vadd.f32 %v197, %v198
      %v200 = vrot.slane %v199, 2
      %v201 = vadd.f32 %v199, %v200
      %v202 = vrot.slane %v201, 1
      %v203 = vadd.f32 %v201, %v202
      %s204 = vtos %v203
      %s205 = smul.f32 %s204, 0.125
      %s206 = scalar_lea.smem [#allocation6], 0
      %207 = sst [smem:[%s206]] %s205
    $region17: #{run.1} parent=1 // pred_fallthru
      _
    // Predicated region
    $region18: #{run.1} parent=1 // pred_check
      _
    $region19: #{run.1} parent=1 // pred_check_branch
      %209 = sbr.rel (0) target = $region21
    $region20: #{run.1} parent=1 // pred_region
      %211 = vsyncadd [#allocation5], 0
      %s213 = sshll.u32 %s1, 4
      %s214 = int_to_ptr.hbm [resolvable:$true] %s213
      %216 = dma.smem_to_hbm [#allocation6], 16, %s214, [#allocation5]
    $region21: #{run.1} parent=1 // pred_fallthru
      _
    // Predicated region
    $region22: #{run.1} parent=1 // pred_check
      _
    $region23: #{run.1} parent=1 // pred_check_branch
      %218 = sbr.rel (0) target = $region25
    $region24: #{run.1} parent=1 // pred_region
      %220 = dma.done [#allocation5], 16
    $region25: #{run.1} parent=1 // pred_fallthru
      _
    %221 = sfence
    %222 = vsyncpa [#allocation4], 1
    %223 = vsyncpa [#allocation5], 1

</llo_original>
